<compile_context>
chip_gen: v5e
topology: v5e:2x2
jax: 0.10.0
libtpu: 0.0.40
codegen_flags: <defaults>
</compile_context>

<pallas_src>
import jax
import jax.numpy as jnp
from jax.experimental import pallas as pl
from jax.experimental.pallas import tpu as pltpu

LANES = 128


def dqn_kernel(x_ref, w1_ref, b1_ref, w2_ref, b2_ref, w3_ref, b3_ref, o_ref):
    # layer1 (bf16 MXU, f32 accumulate) + bias/ReLU in f32
    h1 = jnp.dot(x_ref[...], w1_ref[...], preferred_element_type=jnp.float32)
    h1 = jnp.maximum(h1 + b1_ref[...], 0.0)
    # layer2
    h2 = jnp.dot(h1.astype(w2_ref.dtype), w2_ref[...],
                 preferred_element_type=jnp.float32)
    h2 = jnp.maximum(h2 + b2_ref[...], 0.0)
    # layer3 (no activation), lane-padded output
    out = jnp.dot(h2.astype(w3_ref.dtype), w3_ref[...],
                  preferred_element_type=jnp.float32)
    o_ref[...] = (out + b3_ref[...]).astype(o_ref.dtype)


def dqn_forward(x, params, *, tm=128, compute_dtype=jnp.bfloat16):
    """x: (batch, n_states) f32. params as produced by init_dqn_params."""
    w1, b1, w2, b2, w3, b3 = params
    batch, n_states = x.shape
    hidden = w1.shape[1]
    n_actions = w3.shape[1]

    # ---- lane-pad the final layer to 128 so the output store is lane-dense ----
    n_act_pad = pl.cdiv(n_actions, LANES) * LANES
    w3p = jnp.zeros((hidden, n_act_pad), w3.dtype).at[:, :n_actions].set(w3)
    b3p = jnp.zeros((1, n_act_pad), b3.dtype).at[:, :n_actions].set(b3)

    # ---- pad batch up to a multiple of the MXU-aligned tile ----
    padded_batch = pl.cdiv(batch, tm) * tm
    if padded_batch != batch:
        x = jnp.pad(x, ((0, padded_batch - batch), (0, 0)))

    # ---- cast matmul operands to bf16 once (biases stay f32) ----
    xc = x.astype(compute_dtype)
    w1c = w1.astype(compute_dtype)
    w2c = w2.astype(compute_dtype)
    w3c = w3p.astype(compute_dtype)

    grid = (padded_batch // tm,)

    def nbytes(a):
        return a.size * a.dtype.itemsize

    flops = 2 * padded_batch * (n_states * hidden + hidden * hidden + hidden * n_act_pad)
    bytes_accessed = (sum(nbytes(a) for a in (xc, w1c, b1, w2c, b2, w3c, b3p))
                      + padded_batch * n_act_pad * 4)
    cost = pl.CostEstimate(flops=flops, transcendentals=0,
                           bytes_accessed=bytes_accessed)

    out = pl.pallas_call(
        dqn_kernel,
        out_shape=jax.ShapeDtypeStruct((padded_batch, n_act_pad), jnp.float32),
        grid_spec=pltpu.PrefetchScalarGridSpec(
            num_scalar_prefetch=0,
            grid=grid,
            in_specs=[
                # x: tiled over the batch grid axis
                pl.BlockSpec((tm, n_states), lambda i: (i, 0)),
                # weights / biases: resident (constant block index across grid)
                pl.BlockSpec((n_states, hidden), lambda i: (0, 0)),
                pl.BlockSpec((1, hidden), lambda i: (0, 0)),
                pl.BlockSpec((hidden, hidden), lambda i: (0, 0)),
                pl.BlockSpec((1, hidden), lambda i: (0, 0)),
                pl.BlockSpec((hidden, n_act_pad), lambda i: (0, 0)),
                pl.BlockSpec((1, n_act_pad), lambda i: (0, 0)),
            ],
            out_specs=pl.BlockSpec((tm, n_act_pad), lambda i: (i, 0)),
        ),
        compiler_params=pltpu.CompilerParams(
            dimension_semantics=("parallel",),
        ),
        cost_estimate=cost,
    )(xc, w1c, b1, w2c, b2, w3c, b3p)

    # strip batch padding and lane padding
    return out[:batch, :n_actions]


def init_dqn_params(key, n_states, n_actions, hidden=128):
    """Deterministic init matching PyTorch Linear default (uniform +/- 1/sqrt(fan_in))."""
    def linear(key, fan_in, fan_out):
        kw, kb = jax.random.split(key)
        bound = 1.0 / jnp.sqrt(fan_in)
        # stored as (in, out) so kernel computes x @ W + b
        w = jax.random.uniform(kw, (fan_in, fan_out), jnp.float32, -bound, bound)
        b = jax.random.uniform(kb, (1, fan_out), jnp.float32, -bound, bound)
        return w, b

    k1, k2, k3 = jax.random.split(key, 3)
    w1, b1 = linear(k1, n_states, hidden)
    w2, b2 = linear(k2, hidden, hidden)
    w3, b3 = linear(k3, hidden, n_actions)
    return (w1, b1, w2, b2, w3, b3)


def dqn_ref(x, params, compute_dtype=jnp.bfloat16):
    """Pure-JAX reference of the PyTorch forward, using the same bf16 operands
    with f32 accumulation as the kernel."""
    w1, b1, w2, b2, w3, b3 = params
    cd = compute_dtype
    h = jnp.dot(x.astype(cd), w1.astype(cd), preferred_element_type=jnp.float32)
    h = jnp.maximum(h + b1, 0.0)
    h = jnp.dot(h.astype(cd), w2.astype(cd), preferred_element_type=jnp.float32)
    h = jnp.maximum(h + b2, 0.0)
    return jnp.dot(h.astype(cd), w3.astype(cd),
                   preferred_element_type=jnp.float32) + b3


if __name__ == "__main__":
    key = jax.random.PRNGKey(0)
    n_states, n_actions = 32, 8

    k_params, k_x1, k_x2 = jax.random.split(key, 3)
    params = init_dqn_params(k_params, n_states, n_actions)

    # Small single-tile case (grid = (1,)), matches typical DQN acting batch.
    x_small = jax.random.normal(k_x1, (4, n_states), jnp.float32)
    out_small = jax.block_until_ready(dqn_forward(x_small, params))
    ref_small = dqn_ref(x_small, params)
    assert out_small.shape == (4, n_actions)
    assert jnp.allclose(out_small, ref_small, atol=1e-3, rtol=1e-3), \
        "mismatch vs reference (small batch)"

    # Multi-tile case exercising the batch grid + padding (grid = (3,)).
    x_big = jax.random.normal(k_x2, (260, n_states), jnp.float32)
    out_big = jax.block_until_ready(dqn_forward(x_big, params))
    ref_big = dqn_ref(x_big, params)
    assert out_big.shape == (260, n_actions)
    assert jnp.allclose(out_big, ref_big, atol=1e-3, rtol=1e-3), \
        "mismatch vs reference (tiled batch)"

    print("KERNEL_OK")
</pallas_src>

<mosaic_0001>
module attributes {stable_mosaic.version = 11 : i64} {
  func.func @dqn_kernel(%arg0: i32, %arg1: memref<128x32xbf16, #tpu.memory_space<vmem>>, %arg2: memref<32x128xbf16, #tpu.memory_space<vmem>>, %arg3: memref<1x128xf32, #tpu.memory_space<vmem>>, %arg4: memref<128x128xbf16, #tpu.memory_space<vmem>>, %arg5: memref<1x128xf32, #tpu.memory_space<vmem>>, %arg6: memref<128x128xbf16, #tpu.memory_space<vmem>>, %arg7: memref<1x128xf32, #tpu.memory_space<vmem>>, %arg8: memref<128x128xf32, #tpu.memory_space<vmem>>) attributes {dimension_semantics = [#tpu.dimension_semantics<parallel>], iteration_bounds = array<i64: 1>, scalar_prefetch = 0 : i64, scratch_operands = 0 : i64, tpu.core_type = #tpu.core_type<tc>, window_params = [{transform_indices = @transform_0, window_bounds = array<i64: 128, 32>}, {pipeline_mode = #tpu.pipeline_mode<synchronous>, transform_indices = @transform_1, window_bounds = array<i64: 32, 128>}, {pipeline_mode = #tpu.pipeline_mode<synchronous>, transform_indices = @transform_2, window_bounds = array<i64: 1, 128>}, {pipeline_mode = #tpu.pipeline_mode<synchronous>, transform_indices = @transform_3, window_bounds = array<i64: 128, 128>}, {pipeline_mode = #tpu.pipeline_mode<synchronous>, transform_indices = @transform_4, window_bounds = array<i64: 1, 128>}, {pipeline_mode = #tpu.pipeline_mode<synchronous>, transform_indices = @transform_5, window_bounds = array<i64: 128, 128>}, {pipeline_mode = #tpu.pipeline_mode<synchronous>, transform_indices = @transform_6, window_bounds = array<i64: 1, 128>}, {transform_indices = @transform_7, window_bounds = array<i64: 128, 128>}]} {
    %c0 = arith.constant 0 : index
    %c0_0 = arith.constant 0 : index
    %0 = vector.load %arg1[%c0, %c0_0] : memref<128x32xbf16, #tpu.memory_space<vmem>>, vector<128x32xbf16>
    %c0_1 = arith.constant 0 : index
    %c0_2 = arith.constant 0 : index
    %1 = vector.load %arg2[%c0_1, %c0_2] : memref<32x128xbf16, #tpu.memory_space<vmem>>, vector<32x128xbf16>
    %cst = arith.constant dense<0.000000e+00> : vector<128x128xf32>
    %2 = tpu.matmul %0, %1, %cst {dimension_numbers = #tpu.dot_dimension_numbers<[1], [0], [0], [1], [0, 0, 1, 1], [], []>} : vector<128x32xbf16>, vector<32x128xbf16>, vector<128x128xf32> -> vector<128x128xf32>
    %c0_3 = arith.constant 0 : index
    %c0_4 = arith.constant 0 : index
    %3 = vector.load %arg3[%c0_3, %c0_4] : memref<1x128xf32, #tpu.memory_space<vmem>>, vector<1x128xf32>
    %4 = vector.broadcast %3 : vector<1x128xf32> to vector<128x128xf32>
    %5 = arith.addf %2, %4 : vector<128x128xf32>
    %cst_5 = arith.constant 0.000000e+00 : f32
    %6 = vector.broadcast %cst_5 : f32 to vector<128x128xf32>
    %7 = arith.maximumf %5, %6 : vector<128x128xf32>
    %8 = arith.truncf %7 : vector<128x128xf32> to vector<128x128xbf16>
    %c0_6 = arith.constant 0 : index
    %c0_7 = arith.constant 0 : index
    %9 = vector.load %arg4[%c0_6, %c0_7] : memref<128x128xbf16, #tpu.memory_space<vmem>>, vector<128x128xbf16>
    %cst_8 = arith.constant dense<0.000000e+00> : vector<128x128xf32>
    %10 = tpu.matmul %8, %9, %cst_8 {dimension_numbers = #tpu.dot_dimension_numbers<[1], [0], [0], [1], [0, 0, 1, 1], [], []>} : vector<128x128xbf16>, vector<128x128xbf16>, vector<128x128xf32> -> vector<128x128xf32>
    %c0_9 = arith.constant 0 : index
    %c0_10 = arith.constant 0 : index
    %11 = vector.load %arg5[%c0_9, %c0_10] : memref<1x128xf32, #tpu.memory_space<vmem>>, vector<1x128xf32>
    %12 = vector.broadcast %11 : vector<1x128xf32> to vector<128x128xf32>
    %13 = arith.addf %10, %12 : vector<128x128xf32>
    %cst_11 = arith.constant 0.000000e+00 : f32
    %14 = vector.broadcast %cst_11 : f32 to vector<128x128xf32>
    %15 = arith.maximumf %13, %14 : vector<128x128xf32>
    %16 = arith.truncf %15 : vector<128x128xf32> to vector<128x128xbf16>
    %c0_12 = arith.constant 0 : index
    %c0_13 = arith.constant 0 : index
    %17 = vector.load %arg6[%c0_12, %c0_13] : memref<128x128xbf16, #tpu.memory_space<vmem>>, vector<128x128xbf16>
    %cst_14 = arith.constant dense<0.000000e+00> : vector<128x128xf32>
    %18 = tpu.matmul %16, %17, %cst_14 {dimension_numbers = #tpu.dot_dimension_numbers<[1], [0], [0], [1], [0, 0, 1, 1], [], []>} : vector<128x128xbf16>, vector<128x128xbf16>, vector<128x128xf32> -> vector<128x128xf32>
    %c0_15 = arith.constant 0 : index
    %c0_16 = arith.constant 0 : index
    %19 = vector.load %arg7[%c0_15, %c0_16] : memref<1x128xf32, #tpu.memory_space<vmem>>, vector<1x128xf32>
    %20 = vector.broadcast %19 : vector<1x128xf32> to vector<128x128xf32>
    %21 = arith.addf %18, %20 : vector<128x128xf32>
    %c0_17 = arith.constant 0 : index
    %c0_18 = arith.constant 0 : index
    %22 = vector.load %arg8[%c0_17, %c0_18] : memref<128x128xf32, #tpu.memory_space<vmem>>, vector<128x128xf32>
    tpu.vector_store %arg8[%c0_17, %c0_18], %21 {strides = array<i32>} : memref<128x128xf32, #tpu.memory_space<vmem>>, vector<128x128xf32>,
    return
  }
  func.func @transform_0(%arg0: i32) -> (i32, i32) {
    %c0_i32 = arith.constant 0 : i32
    %c0_i32_0 = arith.constant 0 : i32
    return %arg0, %c0_i32 : i32, i32
  }
  func.func @transform_1(%arg0: i32) -> (i32, i32) {
    %c0_i32 = arith.constant 0 : i32
    %c0_i32_0 = arith.constant 0 : i32
    %c0_i32_1 = arith.constant 0 : i32
    return %c0_i32, %c0_i32_0 : i32, i32
  }
  func.func @transform_2(%arg0: i32) -> (i32, i32) {
    %c0_i32 = arith.constant 0 : i32
    %c0_i32_0 = arith.constant 0 : i32
    %c0_i32_1 = arith.constant 0 : i32
    return %c0_i32, %c0_i32_0 : i32, i32
  }
  func.func @transform_3(%arg0: i32) -> (i32, i32) {
    %c0_i32 = arith.constant 0 : i32
    %c0_i32_0 = arith.constant 0 : i32
    %c0_i32_1 = arith.constant 0 : i32
    return %c0_i32, %c0_i32_0 : i32, i32
  }
  func.func @transform_4(%arg0: i32) -> (i32, i32) {
    %c0_i32 = arith.constant 0 : i32
    %c0_i32_0 = arith.constant 0 : i32
    %c0_i32_1 = arith.constant 0 : i32
    return %c0_i32, %c0_i32_0 : i32, i32
  }
  func.func @transform_5(%arg0: i32) -> (i32, i32) {
    %c0_i32 = arith.constant 0 : i32
    %c0_i32_0 = arith.constant 0 : i32
    %c0_i32_1 = arith.constant 0 : i32
    return %c0_i32, %c0_i32_0 : i32, i32
  }
  func.func @transform_6(%arg0: i32) -> (i32, i32) {
    %c0_i32 = arith.constant 0 : i32
    %c0_i32_0 = arith.constant 0 : i32
    %c0_i32_1 = arith.constant 0 : i32
    return %c0_i32, %c0_i32_0 : i32, i32
  }
  func.func @transform_7(%arg0: i32) -> (i32, i32) {
    %c0_i32 = arith.constant 0 : i32
    %c0_i32_0 = arith.constant 0 : i32
    return %arg0, %c0_i32 : i32, i32
  }
}

</mosaic_0001>

<llo_original>
// kernel: tpu_custom_call.1
$region0: #{tpu_custom_call.1}
  #allocation0 [shape = 'u32[]', space=smem, size = 0x4, offset = 0x4, fixed_abs, tag = 'smem constant byte address 0x4 - core index']
  #allocation1 [shape = 'u32[72,128]{1,0:T(1,128)}', space=vmem, size = 0x9000, scoped, tag = 'internal scratch']
  %s0 = inlined_call_operand.vmem [shape: bf16[128,32], index: 0, kind: input, shape index: {}]
  %s1 = inlined_call_operand.vmem [shape: bf16[32,128], index: 1, kind: input, shape index: {}]
  %s2 = inlined_call_operand.vmem [shape: f32[1,128], index: 2, kind: input, shape index: {}]
  %s3 = inlined_call_operand.vmem [shape: bf16[128,128], index: 3, kind: input, shape index: {}]
  %s4 = inlined_call_operand.vmem [shape: f32[1,128], index: 4, kind: input, shape index: {}]
  %s5 = inlined_call_operand.hbm [shape: bf16[128,128], index: 5, kind: input, shape index: {}]
  %s6 = inlined_call_operand.vmem [shape: f32[1,128], index: 6, kind: input, shape index: {}]
  %s7 = inlined_call_operand.hbm [shape: f32[128,128], index: 7, kind: output, shape index: {}]
  %s8 = sld [smem:[#allocation0]]
  $region42: #{tpu_custom_call.1} parent=0
    _
  %s10 = ssub.s32 1, %s8
  %s11 = scalar_select 0, %s10, %s8
  $region1: #{tpu_custom_call.1} parent=0
    #allocation2 [shape = 'u8[32768]{0}', space=vmem, size = 0x8000, scoped, tag = 'input window, operand 5, single buffered']
    #allocation3 [shape = 's32[1]{0}', space=sflag, size = 0x4, scoped, tag = 'scoped memory for tpu_custom_call.1']
    #allocation4 [shape = 's32[1]{0}', space=sflag, size = 0x4, scoped, tag = 'scoped memory for tpu_custom_call.1']
    #allocation5 [shape = 'u8[65536]{0}', space=vmem, size = 0x10000, scoped, tag = 'output window, operand 0, single buffered']
    %12 = vsyncpa [#allocation3], 0
    %13 = vsyncpa [#allocation4], 0
    // Predicated region
    $region2: #{tpu_custom_call.1} parent=1 // pred_check
      _
    $region3: #{tpu_custom_call.1} parent=1 // pred_check_branch
      %15 = sbr.rel (0) target = $region5
    $region4: #{tpu_custom_call.1} parent=1 // pred_region
      _
    $region5: #{tpu_custom_call.1} parent=1 // pred_fallthru
      _
    // Predicated region
    $region6: #{tpu_custom_call.1} parent=1 // pred_check
      _
    $region7: #{tpu_custom_call.1} parent=1 // pred_check_branch
      %17 = sbr.rel (0) target = $region9
    $region8: #{tpu_custom_call.1} parent=1 // pred_region
      _
    $region9: #{tpu_custom_call.1} parent=1 // pred_fallthru
      _
    // Predicated region
    $region10: #{tpu_custom_call.1} parent=1 // pred_check
      _
    $region11: #{tpu_custom_call.1} parent=1 // pred_check_branch
      %19 = sbr.rel (0) target = $region13
    $region12: #{tpu_custom_call.1} parent=1 // pred_region
      _
    $region13: #{tpu_custom_call.1} parent=1 // pred_fallthru
      _
    // Predicated region
    $region14: #{tpu_custom_call.1} parent=1 // pred_check
      _
    $region15: #{tpu_custom_call.1} parent=1 // pred_check_branch
      %21 = sbr.rel (0) target = $region17
    $region16: #{tpu_custom_call.1} parent=1 // pred_region
      _
    $region17: #{tpu_custom_call.1} parent=1 // pred_fallthru
      _
    // Predicated region
    $region18: #{tpu_custom_call.1} parent=1 // pred_check
      _
    $region19: #{tpu_custom_call.1} parent=1 // pred_check_branch
      %23 = sbr.rel (0) target = $region21
    $region20: #{tpu_custom_call.1} parent=1 // pred_region
      _
    $region21: #{tpu_custom_call.1} parent=1 // pred_fallthru
      _
    // Predicated region
    $region22: #{tpu_custom_call.1} parent=1 // pred_check
      _
    $region23: #{tpu_custom_call.1} parent=1 // pred_check_branch
      %25 = sbr.rel (0) target = $region25
    $region24: #{tpu_custom_call.1} parent=1 // pred_region
      %27 = vsyncadd [#allocation3], 0
      %s28 = sshll.u32 %s5, 4
      %s29 = int_to_ptr.hbm [resolvable:$true] %s28
      %s30 = sshll.u32 [#allocation2], 4
      %s31 = int_to_ptr.vmem [resolvable:$true] %s30
      %36 = dma.hbm_to_vmem [thread:$0]  %s29, 1024, %s31, [#allocation3], 64, 64, 4
    $region25: #{tpu_custom_call.1} parent=1 // pred_fallthru
      _
    // Predicated region
    $region26: #{tpu_custom_call.1} parent=1 // pred_check
      _
    $region27: #{tpu_custom_call.1} parent=1 // pred_check_branch
      %38 = sbr.rel (0) target = $region29
    $region28: #{tpu_custom_call.1} parent=1 // pred_region
      _
    $region29: #{tpu_custom_call.1} parent=1 // pred_fallthru
      _
    // Predicated region
    $region30: #{tpu_custom_call.1} parent=1 // pred_check
      _
    $region31: #{tpu_custom_call.1} parent=1 // pred_check_branch
      %40 = sbr.rel (0) target = $region33
    $region32: #{tpu_custom_call.1} parent=1 // pred_region
      %42 = dma.done [#allocation3], 1024
    $region33: #{tpu_custom_call.1} parent=1 // pred_fallthru
      _
    %v44 = vld [vmem:[%s0] sm:$0xf]
    %v45 = vld [vmem:[%s0 + $0x4] sm:$0xf]
    %v46 = vld [vmem:[%s0 + $0x8] sm:$0xf]
    %v47 = vld [vmem:[%s0 + $0xc] sm:$0xf]
    %v48 = vld [vmem:[%s0 + $0x10] sm:$0xf]
    %v49 = vld [vmem:[%s0 + $0x14] sm:$0xf]
    %v50 = vld [vmem:[%s0 + $0x18] sm:$0xf]
    %v51 = vld [vmem:[%s0 + $0x1c] sm:$0xf]
    %v52 = vld [vmem:[%s0 + $0x20] sm:$0xf]
    %v53 = vld [vmem:[%s0 + $0x24] sm:$0xf]
    %v54 = vld [vmem:[%s0 + $0x28] sm:$0xf]
    %v55 = vld [vmem:[%s0 + $0x2c] sm:$0xf]
    %v56 = vld [vmem:[%s0 + $0x30] sm:$0xf]
    %v57 = vld [vmem:[%s0 + $0x34] sm:$0xf]
    %v58 = vld [vmem:[%s0 + $0x38] sm:$0xf]
    %v59 = vld [vmem:[%s0 + $0x3c] sm:$0xf]
    %v60 = vld [vmem:[%s1] sm:$0xf]
    %v61 = vld [vmem:[%s1 + $0x4] sm:$0xf]
    %v62 = vld [vmem:[%s1 + $0x8] sm:$0xf]
    %v63 = vld [vmem:[%s1 + $0xc] sm:$0xf]
    %v64 = vld [vmem:[%s2] sm:$0x1]
    %v66 = vperm.slane %v64, 0
    %v84 = vunpack.c.l.b16 %v44
    %v85 = vunpack.c.l.b16 %v45
    %v86 = vunpack.c.l.b16 %v46
    %v87 = vunpack.c.l.b16 %v47
    %v88 = vunpack.c.l.b16 %v48
    %v89 = vunpack.c.l.b16 %v49
    %v90 = vunpack.c.l.b16 %v50
    %v91 = vunpack.c.l.b16 %v51
    %v92 = vunpack.c.l.b16 %v52
    %v93 = vunpack.c.l.b16 %v53
    %v94 = vunpack.c.l.b16 %v54
    %v95 = vunpack.c.l.b16 %v55
    %v96 = vunpack.c.l.b16 %v56
    %v97 = vunpack.c.l.b16 %v57
    %v98 = vunpack.c.l.b16 %v58
    %v99 = vunpack.c.l.b16 %v59
    %v100 = vpack.c.b16 %v85, %v84
    %v101 = vpack.c.b16 %v87, %v86
    %v102 = vpack.c.b16 %v89, %v88
    %v103 = vpack.c.b16 %v91, %v90
    %v104 = vpack.c.b16 %v93, %v92
    %v105 = vpack.c.b16 %v95, %v94
    %v106 = vpack.c.b16 %v97, %v96
    %v107 = vpack.c.b16 %v99, %v98
    %v112 = vunpack.c.l.b16 %v60
    %v113 = vunpack.c.l.b16 %v61
    %v114 = vunpack.c.l.b16 %v62
    %v115 = vunpack.c.l.b16 %v63
    %v116 = vpack.c.b16 %v113, %v112
    %v117 = vpack.c.b16 %v115, %v114
    %vm120 = vcmask 261120
    %v122 = vsel %vm120, %v100, 0
    %v125 = vsel %vm120, %v101, 0
    %v128 = vsel %vm120, %v102, 0
    %v131 = vsel %vm120, %v103, 0
    %v134 = vsel %vm120, %v104, 0
    %v137 = vsel %vm120, %v105, 0
    %v140 = vsel %vm120, %v106, 0
    %v143 = vsel %vm120, %v107, 0
    %145 = vmatpush.bf16.msra.mxu0 0
    %146 = vmatpush.bf16.msra.mxu0 0
    %147 = vmatpush.bf16.msra.mxu0 0
    %148 = vmatpush.bf16.msra.mxu0 0
    %149 = vmatpush.bf16.msra.mxu0 0
    %150 = vmatpush.bf16.msra.mxu0 0
    %151 = vmatpush.bf16.msra.mxu0 %v117
    %152 = vmatpush.bf16.msra.mxu0 %v116
    %153 = vmatmul.bf16.gmra.mxu0 %v122
    %v154 = vpop.f32.mrf.mxu0
    %v155 = vadd.f32 %v66, %v154
    %v156 = vpop.f32.mrf.mxu0
    %v157 = vadd.f32 %v66, %v156
    %158 = vmatmul.bf16.gmra.mxu0 %v125
    %v159 = vpop.f32.mrf.mxu0
    %v160 = vadd.f32 %v66, %v159
    %v161 = vpop.f32.mrf.mxu0
    %v162 = vadd.f32 %v66, %v161
    %163 = vmatmul.bf16.gmra.mxu0 %v128
    %v164 = vpop.f32.mrf.mxu0
    %v165 = vadd.f32 %v66, %v164
    %v166 = vpop.f32.mrf.mxu0
    %v167 = vadd.f32 %v66, %v166
    %168 = vmatmul.bf16.gmra.mxu0 %v131
    %v169 = vpop.f32.mrf.mxu0
    %v170 = vadd.f32 %v66, %v169
    %v171 = vpop.f32.mrf.mxu0
    %v172 = vadd.f32 %v66, %v171
    %173 = vmatmul.bf16.gmra.mxu0 %v134
    %v174 = vpop.f32.mrf.mxu0
    %v175 = vadd.f32 %v66, %v174
    %v176 = vpop.f32.mrf.mxu0
    %v177 = vadd.f32 %v66, %v176
    %178 = vmatmul.bf16.gmra.mxu0 %v137
    %v179 = vpop.f32.mrf.mxu0
    %v180 = vadd.f32 %v66, %v179
    %v181 = vpop.f32.mrf.mxu0
    %v182 = vadd.f32 %v66, %v181
    %183 = vmatmul.bf16.gmra.mxu0 %v140
    %v184 = vpop.f32.mrf.mxu0
    %v185 = vadd.f32 %v66, %v184
    %v186 = vpop.f32.mrf.mxu0
    %v187 = vadd.f32 %v66, %v186
    %188 = vmatmul.bf16.gmra.mxu0 %v143
    %v189 = vpop.f32.mrf.mxu0
    %v190 = vadd.f32 %v66, %v189
    %v191 = vpop.f32.mrf.mxu0
    %v192 = vadd.f32 %v66, %v191
    %193 = vdwg.mxu0
    %v194 = vmax.f32 %v155, 0.0
    %v195 = vmax.f32 %v157, 0.0
    %v196 = vmax.f32 %v160, 0.0
    %v197 = vmax.f32 %v162, 0.0
    %v198 = vmax.f32 %v165, 0.0
    %v199 = vmax.f32 %v167, 0.0
    %v200 = vmax.f32 %v170, 0.0
    %v201 = vmax.f32 %v172, 0.0
    %v202 = vmax.f32 %v175, 0.0
    %v203 = vmax.f32 %v177, 0.0
    %v204 = vmax.f32 %v180, 0.0
    %v205 = vmax.f32 %v182, 0.0
    %v206 = vmax.f32 %v185, 0.0
    %v207 = vmax.f32 %v187, 0.0
    %v208 = vmax.f32 %v190, 0.0
    %v209 = vmax.f32 %v192, 0.0
    %v210 = vpack.c.bf16 %v195, %v194
    %v211 = vpack.c.bf16 %v197, %v196
    %v212 = vpack.c.bf16 %v199, %v198
    %v213 = vpack.c.bf16 %v201, %v200
    %v214 = vpack.c.bf16 %v203, %v202
    %v215 = vpack.c.bf16 %v205, %v204
    %v216 = vpack.c.bf16 %v207, %v206
    %v217 = vpack.c.bf16 %v209, %v208
    %v218 = vld [vmem:[%s3] sm:$0xf]
    %v219 = vld [vmem:[%s3 + $0x4] sm:$0xf]
    %v220 = vld [vmem:[%s3 + $0x8] sm:$0xf]
    %v221 = vld [vmem:[%s3 + $0xc] sm:$0xf]
    %v222 = vld [vmem:[%s3 + $0x10] sm:$0xf]
    %v223 = vld [vmem:[%s3 + $0x14] sm:$0xf]
    %v224 = vld [vmem:[%s3 + $0x18] sm:$0xf]
    %v225 = vld [vmem:[%s3 + $0x1c] sm:$0xf]
    %v226 = vld [vmem:[%s3 + $0x20] sm:$0xf]
    %v227 = vld [vmem:[%s3 + $0x24] sm:$0xf]
    %v228 = vld [vmem:[%s3 + $0x28] sm:$0xf]
    %v229 = vld [vmem:[%s3 + $0x2c] sm:$0xf]
    %v230 = vld [vmem:[%s3 + $0x30] sm:$0xf]
    %v231 = vld [vmem:[%s3 + $0x34] sm:$0xf]
    %v232 = vld [vmem:[%s3 + $0x38] sm:$0xf]
    %v233 = vld [vmem:[%s3 + $0x3c] sm:$0xf]
    %v234 = vld [vmem:[%s4] sm:$0x1]
    %v236 = vperm.slane %v234, 0
    %v254 = vunpack.c.l.b16 %v218
    %v255 = vunpack.c.l.b16 %v219
    %v256 = vunpack.c.l.b16 %v220
    %v257 = vunpack.c.l.b16 %v221
    %v258 = vunpack.c.l.b16 %v222
    %v259 = vunpack.c.l.b16 %v223
    %v260 = vunpack.c.l.b16 %v224
    %v261 = vunpack.c.l.b16 %v225
    %v262 = vunpack.c.l.b16 %v226
    %v263 = vunpack.c.l.b16 %v227
    %v264 = vunpack.c.l.b16 %v228
    %v265 = vunpack.c.l.b16 %v229
    %v266 = vunpack.c.l.b16 %v230
    %v267 = vunpack.c.l.b16 %v231
    %v268 = vunpack.c.l.b16 %v232
    %v269 = vunpack.c.l.b16 %v233
    %v270 = vpack.c.b16 %v255, %v254
    %v271 = vpack.c.b16 %v257, %v256
    %v272 = vpack.c.b16 %v259, %v258
    %v273 = vpack.c.b16 %v261, %v260
    %v274 = vpack.c.b16 %v263, %v262
    %v275 = vpack.c.b16 %v265, %v264
    %v276 = vpack.c.b16 %v267, %v266
    %v277 = vpack.c.b16 %v269, %v268
    %286 = vmatpush.bf16.msra.mxu0 %v277
    %287 = vmatpush.bf16.msra.mxu0 %v276
    %288 = vmatpush.bf16.msra.mxu0 %v275
    %289 = vmatpush.bf16.msra.mxu0 %v274
    %290 = vmatpush.bf16.msra.mxu0 %v273
    %291 = vmatpush.bf16.msra.mxu0 %v272
    %292 = vmatpush.bf16.msra.mxu0 %v271
    %293 = vmatpush.bf16.msra.mxu0 %v270
    %294 = vmatmul.bf16.gmra.mxu0 %v210
    %v295 = vpop.f32.mrf.mxu0
    %v296 = vadd.f32 %v236, %v295
    %v297 = vpop.f32.mrf.mxu0
    %v298 = vadd.f32 %v236, %v297
    %299 = vmatmul.bf16.gmra.mxu0 %v211
    %v300 = vpop.f32.mrf.mxu0
    %v301 = vadd.f32 %v236, %v300
    %v302 = vpop.f32.mrf.mxu0
    %v303 = vadd.f32 %v236, %v302
    %304 = vmatmul.bf16.gmra.mxu0 %v212
    %v305 = vpop.f32.mrf.mxu0
    %v306 = vadd.f32 %v236, %v305
    %v307 = vpop.f32.mrf.mxu0
    %v308 = vadd.f32 %v236, %v307
    %309 = vmatmul.bf16.gmra.mxu0 %v213
    %v310 = vpop.f32.mrf.mxu0
    %v311 = vadd.f32 %v236, %v310
    %v312 = vpop.f32.mrf.mxu0
    %v313 = vadd.f32 %v236, %v312
    %314 = vmatmul.bf16.gmra.mxu0 %v214
    %v315 = vpop.f32.mrf.mxu0
    %v316 = vadd.f32 %v236, %v315
    %v317 = vpop.f32.mrf.mxu0
    %v318 = vadd.f32 %v236, %v317
    %319 = vmatmul.bf16.gmra.mxu0 %v215
    %v320 = vpop.f32.mrf.mxu0
    %v321 = vadd.f32 %v236, %v320
    %v322 = vpop.f32.mrf.mxu0
    %v323 = vadd.f32 %v236, %v322
    %324 = vmatmul.bf16.gmra.mxu0 %v216
    %v325 = vpop.f32.mrf.mxu0
    %v326 = vadd.f32 %v236, %v325
    %v327 = vpop.f32.mrf.mxu0
    %v328 = vadd.f32 %v236, %v327
    %329 = vmatmul.bf16.gmra.mxu0 %v217
    %v330 = vpop.f32.mrf.mxu0
    %v331 = vadd.f32 %v236, %v330
    %v332 = vpop.f32.mrf.mxu0
    %v333 = vadd.f32 %v236, %v332
    %334 = vdwg.mxu0
    %v335 = vmax.f32 %v296, 0.0
    %v336 = vmax.f32 %v298, 0.0
    %v337 = vmax.f32 %v301, 0.0
    %v338 = vmax.f32 %v303, 0.0
    %v339 = vmax.f32 %v306, 0.0
    %v340 = vmax.f32 %v308, 0.0
    %v341 = vmax.f32 %v311, 0.0
    %v342 = vmax.f32 %v313, 0.0
    %v343 = vmax.f32 %v316, 0.0
    %v344 = vmax.f32 %v318, 0.0
    %v345 = vmax.f32 %v321, 0.0
    %v346 = vmax.f32 %v323, 0.0
    %v347 = vmax.f32 %v326, 0.0
    %v348 = vmax.f32 %v328, 0.0
    %v349 = vmax.f32 %v331, 0.0
    %v350 = vmax.f32 %v333, 0.0
    %v351 = vpack.c.bf16 %v336, %v335
    %v352 = vpack.c.bf16 %v338, %v337
    %v353 = vpack.c.bf16 %v340, %v339
    %v354 = vpack.c.bf16 %v342, %v341
    %v355 = vpack.c.bf16 %v344, %v343
    %v356 = vpack.c.bf16 %v346, %v345
    %v357 = vpack.c.bf16 %v348, %v347
    %v358 = vpack.c.bf16 %v350, %v349
    %v359 = vld [vmem:[#allocation2] sm:$0xf]
    %v360 = vld [vmem:[#allocation2 + $0x4] sm:$0xf]
    %v361 = vld [vmem:[#allocation2 + $0x8] sm:$0xf]
    %v362 = vld [vmem:[#allocation2 + $0xc] sm:$0xf]
    %v363 = vld [vmem:[#allocation2 + $0x10] sm:$0xf]
    %v364 = vld [vmem:[#allocation2 + $0x14] sm:$0xf]
    %v365 = vld [vmem:[#allocation2 + $0x18] sm:$0xf]
    %v366 = vld [vmem:[#allocation2 + $0x1c] sm:$0xf]
    %v367 = vld [vmem:[#allocation2 + $0x20] sm:$0xf]
    %v368 = vld [vmem:[#allocation2 + $0x24] sm:$0xf]
    %v369 = vld [vmem:[#allocation2 + $0x28] sm:$0xf]
    %v370 = vld [vmem:[#allocation2 + $0x2c] sm:$0xf]
    %v371 = vld [vmem:[#allocation2 + $0x30] sm:$0xf]
    %v372 = vld [vmem:[#allocation2 + $0x34] sm:$0xf]
    %v373 = vld [vmem:[#allocation2 + $0x38] sm:$0xf]
    %v374 = vld [vmem:[#allocation2 + $0x3c] sm:$0xf]
    %v375 = vld [vmem:[%s6] sm:$0x1]
    %v377 = vperm.slane %v375, 0
    %v395 = vunpack.c.l.b16 %v359
    %v396 = vunpack.c.l.b16 %v360
    %v397 = vunpack.c.l.b16 %v361
    %v398 = vunpack.c.l.b16 %v362
    %v399 = vunpack.c.l.b16 %v363
    %v400 = vunpack.c.l.b16 %v364
    %v401 = vunpack.c.l.b16 %v365
    %v402 = vunpack.c.l.b16 %v366
    %v403 = vunpack.c.l.b16 %v367
    %v404 = vunpack.c.l.b16 %v368
    %v405 = vunpack.c.l.b16 %v369
    %v406 = vunpack.c.l.b16 %v370
    %v407 = vunpack.c.l.b16 %v371
    %v408 = vunpack.c.l.b16 %v372
    %v409 = vunpack.c.l.b16 %v373
    %v410 = vunpack.c.l.b16 %v374
    %v411 = vpack.c.b16 %v396, %v395
    %v412 = vpack.c.b16 %v398, %v397
    %v413 = vpack.c.b16 %v400, %v399
    %v414 = vpack.c.b16 %v402, %v401
    %v415 = vpack.c.b16 %v404, %v403
    %v416 = vpack.c.b16 %v406, %v405
    %v417 = vpack.c.b16 %v408, %v407
    %v418 = vpack.c.b16 %v410, %v409
    %427 = vmatpush.bf16.msra.mxu0 %v418
    %428 = vmatpush.bf16.msra.mxu0 %v417
    %429 = vmatpush.bf16.msra.mxu0 %v416
    %430 = vmatpush.bf16.msra.mxu0 %v415
    %431 = vmatpush.bf16.msra.mxu0 %v414
    %432 = vmatpush.bf16.msra.mxu0 %v413
    %433 = vmatpush.bf16.msra.mxu0 %v412
    %434 = vmatpush.bf16.msra.mxu0 %v411
    %435 = vmatmul.bf16.gmra.mxu0 %v351
    %v436 = vpop.f32.mrf.mxu0
    %v437 = vadd.f32 %v377, %v436
    %v438 = vpop.f32.mrf.mxu0
    %v439 = vadd.f32 %v377, %v438
    %440 = vmatmul.bf16.gmra.mxu0 %v352
    %v441 = vpop.f32.mrf.mxu0
    %v442 = vadd.f32 %v377, %v441
    %v443 = vpop.f32.mrf.mxu0
    %v444 = vadd.f32 %v377, %v443
    %445 = vmatmul.bf16.gmra.mxu0 %v353
    %v446 = vpop.f32.mrf.mxu0
    %v447 = vadd.f32 %v377, %v446
    %v448 = vpop.f32.mrf.mxu0
    %v449 = vadd.f32 %v377, %v448
    %450 = vmatmul.bf16.gmra.mxu0 %v354
    %v451 = vpop.f32.mrf.mxu0
    %v452 = vadd.f32 %v377, %v451
    %v453 = vpop.f32.mrf.mxu0
    %v454 = vadd.f32 %v377, %v453
    %455 = vmatmul.bf16.gmra.mxu0 %v355
    %v456 = vpop.f32.mrf.mxu0
    %v457 = vadd.f32 %v377, %v456
    %v458 = vpop.f32.mrf.mxu0
    %v459 = vadd.f32 %v377, %v458
    %460 = vmatmul.bf16.gmra.mxu0 %v356
    %v461 = vpop.f32.mrf.mxu0
    %v462 = vadd.f32 %v377, %v461
    %v463 = vpop.f32.mrf.mxu0
    %v464 = vadd.f32 %v377, %v463
    %465 = vmatmul.bf16.gmra.mxu0 %v357
    %v466 = vpop.f32.mrf.mxu0
    %v467 = vadd.f32 %v377, %v466
    %v468 = vpop.f32.mrf.mxu0
    %v469 = vadd.f32 %v377, %v468
    %470 = vmatmul.bf16.gmra.mxu0 %v358
    %v471 = vpop.f32.mrf.mxu0
    %v472 = vadd.f32 %v377, %v471
    %v473 = vpop.f32.mrf.mxu0
    %v474 = vadd.f32 %v377, %v473
    %475 = vdwg.mxu0
    %476 = vst [vmem:[#allocation5] sm:$0xff] %v437
    %477 = vst [vmem:[#allocation5 + $0x8] sm:$0xff] %v439
    %478 = vst [vmem:[#allocation5 + $0x10] sm:$0xff] %v442
    %479 = vst [vmem:[#allocation5 + $0x18] sm:$0xff] %v444
    %480 = vst [vmem:[#allocation5 + $0x20] sm:$0xff] %v447
    %481 = vst [vmem:[#allocation5 + $0x28] sm:$0xff] %v449
    %482 = vst [vmem:[#allocation5 + $0x30] sm:$0xff] %v452
    %483 = vst [vmem:[#allocation5 + $0x38] sm:$0xff] %v454
    %484 = vst [vmem:[#allocation5 + $0x40] sm:$0xff] %v457
    %485 = vst [vmem:[#allocation5 + $0x48] sm:$0xff] %v459
    %486 = vst [vmem:[#allocation5 + $0x50] sm:$0xff] %v462
    %487 = vst [vmem:[#allocation5 + $0x58] sm:$0xff] %v464
    %488 = vst [vmem:[#allocation5 + $0x60] sm:$0xff] %v467
    %489 = vst [vmem:[#allocation5 + $0x68] sm:$0xff] %v469
    %490 = vst [vmem:[#allocation5 + $0x70] sm:$0xff] %v472
    %491 = vst [vmem:[#allocation5 + $0x78] sm:$0xff] %v474
    // Predicated region
    $region34: #{tpu_custom_call.1} parent=1 // pred_check
      _
    $region35: #{tpu_custom_call.1} parent=1 // pred_check_branch
      %493 = sbr.rel (0) target = $region37
    $region36: #{tpu_custom_call.1} parent=1 // pred_region
      %495 = vsyncadd [#allocation4], 0
      %s496 = sshll.u32 [#allocation5], 4
      %s497 = int_to_ptr.vmem [resolvable:$true] %s496
      %s498 = sshll.u32 %s7, 4
      %s499 = int_to_ptr.hbm [resolvable:$true] %s498
      %504 = dma.vmem_to_hbm [thread:$0]  %s497, 2048, %s499, [#allocation4], 128, 128, 8
    $region37: #{tpu_custom_call.1} parent=1 // pred_fallthru
      _
    // Predicated region
    $region38: #{tpu_custom_call.1} parent=1 // pred_check
      _
    $region39: #{tpu_custom_call.1} parent=1 // pred_check_branch
      %506 = sbr.rel (0) target = $region41
    $region40: #{tpu_custom_call.1} parent=1 // pred_region
      %508 = dma.done [#allocation4], 2048
    $region41: #{tpu_custom_call.1} parent=1 // pred_fallthru
      _
    %509 = vsyncpa [#allocation3], 1
    %510 = vsyncpa [#allocation4], 1

</llo_original>
